<compile_context>
chip_gen: v7x
topology: tpu7x:2x2x1
jax: 0.10.0
libtpu: 0.0.40
codegen_flags: <defaults>
</compile_context>

<pallas_src>
import functools

import jax
import jax.numpy as jnp
from jax.experimental import pallas as pl
from jax.experimental.pallas import tpu as pltpu


def _recognition_kernel(x_ref, y_ref,
                        w1x_ref, w1y_ref, b1_ref,
                        w2_ref, b2_ref,
                        w3_ref, b3_ref,
                        out_ref, *, z_dim):
    x = x_ref[...].astype(jnp.float32)
    y = y_ref[...].astype(jnp.float32)

    # fc1 + ReLU, with the (x | y_flat) concat folded into two partial dots:
    # concat(x, y) @ W1 == x @ W1[:x_dim] + y @ W1[x_dim:].
    h1 = jnp.dot(x, w1x_ref[...], preferred_element_type=jnp.float32)
    h1 = h1 + jnp.dot(y, w1y_ref[...], preferred_element_type=jnp.float32)
    h1 = jnp.maximum(h1 + b1_ref[...], 0.0)

    # fc2 + ReLU
    h2 = jnp.dot(h1, w2_ref[...], preferred_element_type=jnp.float32)
    h2 = jnp.maximum(h2 + b2_ref[...], 0.0)

    # Fused heads: [fc31 | fc32] in a single matmul, one lane-dense store.
    # exp() only applies to the second z_dim lanes (the fc32 half).
    o = jnp.dot(h2, w3_ref[...], preferred_element_type=jnp.float32) + b3_ref[...]
    col = jax.lax.broadcasted_iota(jnp.int32, o.shape, 1)
    out_ref[...] = jnp.where(col < z_dim, o, jnp.exp(o))


def prepare_params(raw):
    """Convert torch-layout params (already (in, out)) into the fused layout
    the kernel consumes. Pure parameter plumbing, done once outside the kernel."""
    x_dim_plus_y, _ = raw["w1"].shape
    x_dim = raw["x_dim"]
    return dict(
        w1x=raw["w1"][:x_dim, :],
        w1y=raw["w1"][x_dim:, :],
        b1=raw["b1"],
        w2=raw["w2"],
        b2=raw["b2"],
        w3=jnp.concatenate([raw["w31"], raw["w32"]], axis=1),
        b3=jnp.concatenate([raw["b31"], raw["b32"]], axis=1),
    )


def recognition_net(x, y, params, *, batch_tile=512):
    """Forward pass matching RecognitionNet.forward(x, y).

    x: (B, x_dim) float array
    y: (B, ...) array, flattened to (B, y_dim)
    params: dict from prepare_params() (w1x, w1y, b1, w2, b2, w3, b3)
    Returns (z_loc, z_scale), both (B, z_dim) float32.
    """
    B = x.shape[0]
    x = x.astype(jnp.float32)
    y_flat = y.reshape(B, -1).astype(jnp.float32)

    w1x, w1y, b1 = params["w1x"], params["w1y"], params["b1"]
    w2, b2 = params["w2"], params["b2"]
    w3, b3 = params["w3"], params["b3"]

    x_dim, h1 = w1x.shape
    y_dim = w1y.shape[0]
    h2 = w2.shape[1]
    two_z = w3.shape[1]
    z_dim = two_z // 2

    kernel = functools.partial(_recognition_kernel, z_dim=z_dim)

    flops = 2 * B * (x_dim * h1 + y_dim * h1 + h1 * h2 + h2 * two_z)
    bytes_accessed = 4 * (x.size + y_flat.size + w1x.size + w1y.size + b1.size
                          + w2.size + b2.size + w3.size + b3.size + B * two_z)
    cost = pl.CostEstimate(flops=flops,
                           transcendentals=B * z_dim,
                           bytes_accessed=bytes_accessed)

    args = (x, y_flat, w1x, w1y, b1, w2, b2, w3, b3)

    if B <= batch_tile:
        # Small-batch path: one block, no grid -> no per-step pipeline overhead.
        out = pl.pallas_call(
            kernel,
            out_shape=jax.ShapeDtypeStruct((B, two_z), jnp.float32),
            cost_estimate=cost,
        )(*args)
    else:
        # Large-batch path: tile the batch, keep weights resident (grid-invariant
        # blocks), mark the batch axis parallel (megacore sharding on v7x,
        # double-buffered activation DMAs everywhere).
        tb = batch_tile
        n_tiles = pl.cdiv(B, tb)
        Bp = n_tiles * tb
        pad = Bp - B
        x_p = jnp.pad(x, ((0, pad), (0, 0))) if pad else x
        y_p = jnp.pad(y_flat, ((0, pad), (0, 0))) if pad else y_flat

        full = lambda a: pl.BlockSpec(a.shape, lambda i: (0,) * a.ndim)
        out = pl.pallas_call(
            kernel,
            out_shape=jax.ShapeDtypeStruct((Bp, two_z), jnp.float32),
            grid=(n_tiles,),
            in_specs=[pl.BlockSpec((tb, x_dim), lambda i: (i, 0)),
                      pl.BlockSpec((tb, y_dim), lambda i: (i, 0)),
                      full(w1x), full(w1y), full(b1),
                      full(w2), full(b2), full(w3), full(b3)],
            out_specs=pl.BlockSpec((tb, two_z), lambda i: (i, 0)),
            compiler_params=pltpu.CompilerParams(
                dimension_semantics=("parallel",)),
            cost_estimate=cost,
        )(x_p, y_p, w1x, w1y, b1, w2, b2, w3, b3)
        out = out[:B]

    return out[:, :z_dim], out[:, z_dim:]


def init_params(key, x_dim, y_dim, z_dim, hidden_1, hidden_2):
    """Deterministic synthetic init (roughly matching nn.Linear's uniform init),
    torch-equivalent layout with weights stored as (in_features, out_features)."""
    def linear(key, fan_in, fan_out):
        kw, kb = jax.random.split(key)
        bound = 1.0 / jnp.sqrt(fan_in)
        w = jax.random.uniform(kw, (fan_in, fan_out), jnp.float32, -bound, bound)
        b = jax.random.uniform(kb, (1, fan_out), jnp.float32, -bound, bound)
        return w, b

    k1, k2, k3, k4 = jax.random.split(key, 4)
    w1, b1 = linear(k1, x_dim + y_dim, hidden_1)
    w2, b2 = linear(k2, hidden_1, hidden_2)
    w31, b31 = linear(k3, hidden_2, z_dim)
    w32, b32 = linear(k4, hidden_2, z_dim)
    return dict(w1=w1, b1=b1, w2=w2, b2=b2,
                w31=w31, b31=b31, w32=w32, b32=b32, x_dim=x_dim)


def _reference(x, y, p):
    B = x.shape[0]
    c = jnp.concatenate([x, y.reshape(B, -1)], axis=1).astype(jnp.float32)
    h1 = jnp.maximum(c @ p["w1"] + p["b1"], 0.0)
    h2 = jnp.maximum(h1 @ p["w2"] + p["b2"], 0.0)
    return h2 @ p["w31"] + p["b31"], jnp.exp(h2 @ p["w32"] + p["b32"])


if __name__ == "__main__":
    # Small shapes consistent with the module's forward.
    x_dim = 16
    y_h, y_w = 4, 4          # y arrives as (B, 4, 4) and gets flattened
    y_dim = y_h * y_w
    z_dim = 8
    hidden_1, hidden_2 = 32, 32

    key = jax.random.PRNGKey(0)
    k_params, k_x, k_y, k_x2, k_y2 = jax.random.split(key, 5)

    raw = init_params(k_params, x_dim, y_dim, z_dim, hidden_1, hidden_2)
    params = prepare_params(raw)

    # --- small-batch (gridless) path ---
    B = 8
    x = jax.random.normal(k_x, (B, x_dim), jnp.float32)
    y = jax.random.normal(k_y, (B, y_h, y_w), jnp.float32)

    z_loc, z_scale = recognition_net(x, y, params)
    jax.block_until_ready((z_loc, z_scale))

    ref_loc, ref_scale = _reference(x, y, raw)
    assert z_loc.shape == (B, z_dim) and z_scale.shape == (B, z_dim)
    assert jnp.allclose(z_loc, ref_loc, atol=1e-5, rtol=1e-5)
    assert jnp.allclose(z_scale, ref_scale, atol=1e-5, rtol=1e-5)

    # --- large-batch (batch-tiled, 'parallel') path ---
    B2 = 1024
    x2 = jax.random.normal(k_x2, (B2, x_dim), jnp.float32)
    y2 = jax.random.normal(k_y2, (B2, y_h, y_w), jnp.float32)

    z_loc2, z_scale2 = recognition_net(x2, y2, params, batch_tile=512)
    jax.block_until_ready((z_loc2, z_scale2))

    ref_loc2, ref_scale2 = _reference(x2, y2, raw)
    assert z_loc2.shape == (B2, z_dim) and z_scale2.shape == (B2, z_dim)
    assert jnp.allclose(z_loc2, ref_loc2, atol=1e-5, rtol=1e-5)
    assert jnp.allclose(z_scale2, ref_scale2, atol=1e-5, rtol=1e-5)

    print("KERNEL_OK")
</pallas_src>

<mosaic_0001>
module attributes {stable_mosaic.version = 11 : i64} {
  func.func @_recognition_kernel(%arg0: memref<8x16xf32, #tpu.memory_space<vmem>>, %arg1: memref<8x16xf32, #tpu.memory_space<vmem>>, %arg2: memref<16x32xf32, #tpu.memory_space<vmem>>, %arg3: memref<16x32xf32, #tpu.memory_space<vmem>>, %arg4: memref<1x32xf32, #tpu.memory_space<vmem>>, %arg5: memref<32x32xf32, #tpu.memory_space<vmem>>, %arg6: memref<1x32xf32, #tpu.memory_space<vmem>>, %arg7: memref<32x16xf32, #tpu.memory_space<vmem>>, %arg8: memref<1x16xf32, #tpu.memory_space<vmem>>, %arg9: memref<8x16xf32, #tpu.memory_space<vmem>>) attributes {dimension_semantics = [], scalar_prefetch = 0 : i64, scratch_operands = 0 : i64, tpu.core_type = #tpu.core_type<tc>} {
    %c0 = arith.constant 0 : index
    %c0_0 = arith.constant 0 : index
    %0 = vector.load %arg0[%c0, %c0_0] : memref<8x16xf32, #tpu.memory_space<vmem>>, vector<8x16xf32>
    %c0_1 = arith.constant 0 : index
    %c0_2 = arith.constant 0 : index
    %1 = vector.load %arg1[%c0_1, %c0_2] : memref<8x16xf32, #tpu.memory_space<vmem>>, vector<8x16xf32>
    %c0_3 = arith.constant 0 : index
    %c0_4 = arith.constant 0 : index
    %2 = vector.load %arg2[%c0_3, %c0_4] : memref<16x32xf32, #tpu.memory_space<vmem>>, vector<16x32xf32>
    %cst = arith.constant dense<0.000000e+00> : vector<8x32xf32>
    %3 = tpu.matmul %0, %2, %cst {dimension_numbers = #tpu.dot_dimension_numbers<[1], [0], [0], [1], [0, 0, 1, 1], [], []>} : vector<8x16xf32>, vector<16x32xf32>, vector<8x32xf32> -> vector<8x32xf32>
    %c0_5 = arith.constant 0 : index
    %c0_6 = arith.constant 0 : index
    %4 = vector.load %arg3[%c0_5, %c0_6] : memref<16x32xf32, #tpu.memory_space<vmem>>, vector<16x32xf32>
    %cst_7 = arith.constant dense<0.000000e+00> : vector<8x32xf32>
    %5 = tpu.matmul %1, %4, %cst_7 {dimension_numbers = #tpu.dot_dimension_numbers<[1], [0], [0], [1], [0, 0, 1, 1], [], []>} : vector<8x16xf32>, vector<16x32xf32>, vector<8x32xf32> -> vector<8x32xf32>
    %6 = arith.addf %3, %5 : vector<8x32xf32>
    %c0_8 = arith.constant 0 : index
    %c0_9 = arith.constant 0 : index
    %7 = vector.load %arg4[%c0_8, %c0_9] : memref<1x32xf32, #tpu.memory_space<vmem>>, vector<1x32xf32>
    %8 = vector.broadcast %7 : vector<1x32xf32> to vector<8x32xf32>
    %9 = arith.addf %6, %8 : vector<8x32xf32>
    %cst_10 = arith.constant 0.000000e+00 : f32
    %10 = vector.broadcast %cst_10 : f32 to vector<8x32xf32>
    %11 = arith.maximumf %9, %10 : vector<8x32xf32>
    %c0_11 = arith.constant 0 : index
    %c0_12 = arith.constant 0 : index
    %12 = vector.load %arg5[%c0_11, %c0_12] : memref<32x32xf32, #tpu.memory_space<vmem>>, vector<32x32xf32>
    %cst_13 = arith.constant dense<0.000000e+00> : vector<8x32xf32>
    %13 = tpu.matmul %11, %12, %cst_13 {dimension_numbers = #tpu.dot_dimension_numbers<[1], [0], [0], [1], [0, 0, 1, 1], [], []>} : vector<8x32xf32>, vector<32x32xf32>, vector<8x32xf32> -> vector<8x32xf32>
    %c0_14 = arith.constant 0 : index
    %c0_15 = arith.constant 0 : index
    %14 = vector.load %arg6[%c0_14, %c0_15] : memref<1x32xf32, #tpu.memory_space<vmem>>, vector<1x32xf32>
    %15 = vector.broadcast %14 : vector<1x32xf32> to vector<8x32xf32>
    %16 = arith.addf %13, %15 : vector<8x32xf32>
    %cst_16 = arith.constant 0.000000e+00 : f32
    %17 = vector.broadcast %cst_16 : f32 to vector<8x32xf32>
    %18 = arith.maximumf %16, %17 : vector<8x32xf32>
    %c0_17 = arith.constant 0 : index
    %c0_18 = arith.constant 0 : index
    %19 = vector.load %arg7[%c0_17, %c0_18] : memref<32x16xf32, #tpu.memory_space<vmem>>, vector<32x16xf32>
    %cst_19 = arith.constant dense<0.000000e+00> : vector<8x16xf32>
    %20 = tpu.matmul %18, %19, %cst_19 {dimension_numbers = #tpu.dot_dimension_numbers<[1], [0], [0], [1], [0, 0, 1, 1], [], []>} : vector<8x32xf32>, vector<32x16xf32>, vector<8x16xf32> -> vector<8x16xf32>
    %c0_20 = arith.constant 0 : index
    %c0_21 = arith.constant 0 : index
    %21 = vector.load %arg8[%c0_20, %c0_21] : memref<1x16xf32, #tpu.memory_space<vmem>>, vector<1x16xf32>
    %22 = vector.broadcast %21 : vector<1x16xf32> to vector<8x16xf32>
    %23 = arith.addf %20, %22 : vector<8x16xf32>
    %24 = tpu.iota {dimensions = array<i32: 1>} : vector<8x16xi32>
    %c8_i32 = arith.constant 8 : i32
    %25 = vector.broadcast %c8_i32 : i32 to vector<8x16xi32>
    %26 = arith.cmpi slt, %24, %25 : vector<8x16xi32>
    %27 = math.exp %23 : vector<8x16xf32>
    %28 = arith.select %26, %23, %27 : vector<8x16xi1>, vector<8x16xf32>
    %c0_22 = arith.constant 0 : index
    %c0_23 = arith.constant 0 : index
    %29 = vector.load %arg9[%c0_22, %c0_23] : memref<8x16xf32, #tpu.memory_space<vmem>>, vector<8x16xf32>
    tpu.vector_store %arg9[%c0_22, %c0_23], %28 {strides = array<i32>} : memref<8x16xf32, #tpu.memory_space<vmem>>, vector<8x16xf32>,
    return
  }
}

</mosaic_0001>

<llo_original>
// kernel: tpu_custom_call.1
$region0: #{tpu_custom_call.1}
  #allocation0 [shape = 'u32[]', space=smem, size = 0x4, offset = 0x4, fixed_abs, tag = 'smem constant byte address 0x4 - core index']
  #allocation1 [shape = 'u32[144,128]{1,0:T(1,128)}', space=vmem, size = 0x12000, scoped, tag = 'internal scratch']
  %s0 = inlined_call_operand.vmem [shape: f32[8,16], index: 0, kind: input, shape index: {}]
  %s1 = inlined_call_operand.hbm [shape: f32[8,16], index: 1, kind: input, shape index: {}]
  %s2 = inlined_call_operand.vmem [shape: f32[16,32], index: 2, kind: input, shape index: {}]
  %s3 = inlined_call_operand.hbm [shape: f32[16,32], index: 3, kind: input, shape index: {}]
  %s4 = inlined_call_operand.vmem [shape: f32[1,32], index: 4, kind: input, shape index: {}]
  %s5 = inlined_call_operand.vmem [shape: f32[32,32], index: 5, kind: input, shape index: {}]
  %s6 = inlined_call_operand.vmem [shape: f32[1,32], index: 6, kind: input, shape index: {}]
  %s7 = inlined_call_operand.vmem [shape: f32[32,16], index: 7, kind: input, shape index: {}]
  %s8 = inlined_call_operand.vmem [shape: f32[1,16], index: 8, kind: input, shape index: {}]
  %s9 = inlined_call_operand.hbm [shape: f32[8,16], index: 9, kind: output, shape index: {}]
  %s10 = sld [smem:[#allocation0]]
  $region54: #{tpu_custom_call.1} parent=0
    _
  %s12 = ssub.s32 1, %s10
  %s13 = scalar_select 0, %s12, %s10
  $region1: #{tpu_custom_call.1} parent=0
    #allocation2 [shape = 'u8[4096]{0}', space=vmem, size = 0x1000, scoped, tag = 'input window, operand 1, single buffered']
    #allocation3 [shape = 's32[1]{0}', space=sflag, size = 0x4, scoped, tag = 'scoped memory for tpu_custom_call.1']
    #allocation4 [shape = 's32[1]{0}', space=sflag, size = 0x4, scoped, tag = 'scoped memory for tpu_custom_call.1']
    #allocation5 [shape = 'u8[8192]{0}', space=vmem, size = 0x2000, scoped, tag = 'input window, operand 3, single buffered']
    #allocation6 [shape = 's32[1]{0}', space=sflag, size = 0x4, scoped, tag = 'scoped memory for tpu_custom_call.1']
    #allocation7 [shape = 'u8[4096]{0}', space=vmem, size = 0x1000, scoped, tag = 'output window, operand 0, single buffered']
    %14 = vsyncpa [#allocation3], 0
    %15 = vsyncpa [#allocation6], 0
    %16 = vsyncpa [#allocation4], 0
    // Predicated region
    $region2: #{tpu_custom_call.1} parent=1 // pred_check
      _
    $region3: #{tpu_custom_call.1} parent=1 // pred_check_branch
      %18 = sbr.rel (0) target = $region5
    $region4: #{tpu_custom_call.1} parent=1 // pred_region
      _
    $region5: #{tpu_custom_call.1} parent=1 // pred_fallthru
      _
    // Predicated region
    $region6: #{tpu_custom_call.1} parent=1 // pred_check
      _
    $region7: #{tpu_custom_call.1} parent=1 // pred_check_branch
      %20 = sbr.rel (0) target = $region9
    $region8: #{tpu_custom_call.1} parent=1 // pred_region
      %s22 = ssub.s32 128, 128
      %23 = vsyncadd [#allocation3], %s22
      %s25 = sshll.u32 [#allocation2], 4
      %s26 = int_to_ptr.vmem [resolvable:$true] %s25
      %28 = dma.hbm_to_vmem [thread:$0]  %s1, 128, %s26, [#allocation3]
    $region9: #{tpu_custom_call.1} parent=1 // pred_fallthru
      _
    // Predicated region
    $region10: #{tpu_custom_call.1} parent=1 // pred_check
      _
    $region11: #{tpu_custom_call.1} parent=1 // pred_check_branch
      %30 = sbr.rel (0) target = $region13
    $region12: #{tpu_custom_call.1} parent=1 // pred_region
      _
    $region13: #{tpu_custom_call.1} parent=1 // pred_fallthru
      _
    // Predicated region
    $region14: #{tpu_custom_call.1} parent=1 // pred_check
      _
    $region15: #{tpu_custom_call.1} parent=1 // pred_check_branch
      %32 = sbr.rel (0) target = $region17
    $region16: #{tpu_custom_call.1} parent=1 // pred_region
      %s34 = ssub.s32 256, 256
      %35 = vsyncadd [#allocation6], %s34
      %s36 = sshll.u32 [#allocation5], 4
      %s37 = int_to_ptr.vmem [resolvable:$true] %s36
      %42 = dma.hbm_to_vmem [thread:$0]  %s3, 256, %s37, [#allocation6], 128, 128, 8
    $region17: #{tpu_custom_call.1} parent=1 // pred_fallthru
      _
    // Predicated region
    $region18: #{tpu_custom_call.1} parent=1 // pred_check
      _
    $region19: #{tpu_custom_call.1} parent=1 // pred_check_branch
      %44 = sbr.rel (0) target = $region21
    $region20: #{tpu_custom_call.1} parent=1 // pred_region
      _
    $region21: #{tpu_custom_call.1} parent=1 // pred_fallthru
      _
    // Predicated region
    $region22: #{tpu_custom_call.1} parent=1 // pred_check
      _
    $region23: #{tpu_custom_call.1} parent=1 // pred_check_branch
      %46 = sbr.rel (0) target = $region25
    $region24: #{tpu_custom_call.1} parent=1 // pred_region
      _
    $region25: #{tpu_custom_call.1} parent=1 // pred_fallthru
      _
    // Predicated region
    $region26: #{tpu_custom_call.1} parent=1 // pred_check
      _
    $region27: #{tpu_custom_call.1} parent=1 // pred_check_branch
      %48 = sbr.rel (0) target = $region29
    $region28: #{tpu_custom_call.1} parent=1 // pred_region
      _
    $region29: #{tpu_custom_call.1} parent=1 // pred_fallthru
      _
    // Predicated region
    $region30: #{tpu_custom_call.1} parent=1 // pred_check
      _
    $region31: #{tpu_custom_call.1} parent=1 // pred_check_branch
      %50 = sbr.rel (0) target = $region33
    $region32: #{tpu_custom_call.1} parent=1 // pred_region
      _
    $region33: #{tpu_custom_call.1} parent=1 // pred_fallthru
      _
    // Predicated region
    $region34: #{tpu_custom_call.1} parent=1 // pred_check
      _
    $region35: #{tpu_custom_call.1} parent=1 // pred_check_branch
      %52 = sbr.rel (0) target = $region37
    $region36: #{tpu_custom_call.1} parent=1 // pred_region
      _
    $region37: #{tpu_custom_call.1} parent=1 // pred_fallthru
      _
    // Predicated region
    $region38: #{tpu_custom_call.1} parent=1 // pred_check
      _
    $region39: #{tpu_custom_call.1} parent=1 // pred_check_branch
      %54 = sbr.rel (0) target = $region41
    $region40: #{tpu_custom_call.1} parent=1 // pred_region
      %55 = dma.done [#allocation3], 128
    $region41: #{tpu_custom_call.1} parent=1 // pred_fallthru
      _
    // Predicated region
    $region42: #{tpu_custom_call.1} parent=1 // pred_check
      _
    $region43: #{tpu_custom_call.1} parent=1 // pred_check_branch
      %57 = sbr.rel (0) target = $region45
    $region44: #{tpu_custom_call.1} parent=1 // pred_region
      %58 = dma.done [#allocation6], 256
    $region45: #{tpu_custom_call.1} parent=1 // pred_fallthru
      _
    %v59 = vld [vmem:[%s0] sm:$0xff]
    %v60 = vld [vmem:[#allocation2] sm:$0xff]
    %v61 = vld [vmem:[%s2] sm:$0xff]
    %v62 = vld [vmem:[%s2 + $0x8] sm:$0xff]
    %v63 = vld [vmem:[#allocation5] sm:$0xff]
    %v64 = vld [vmem:[#allocation5 + $0x8] sm:$0xff]
    %vm65 = vcmask 130048
    %v67 = vsel %vm65, %v60, 0
    %69 = vmatprep.subr.mxu0 0.0
    %70 = vmatpush1.msra.mxu0 %v63
    %71 = vmatprep.subr.mxu0 0.0
    %72 = vmatpush1.msra.mxu0 %v64
    %73 = vmatprep.subr.mxu0 0.0
    %74 = vmatpush1.msra.mxu0 0.0
    %75 = vmatprep.subr.mxu0 0.0
    %76 = vmatpush1.msra.mxu0 0.0
    %77 = vmatprep.subr.mxu0 0.0
    %78 = vmatpush1.msra.mxu0 0.0
    %79 = vmatprep.subr.mxu0 0.0
    %80 = vmatpush1.msra.mxu0 0.0
    %81 = vmatprep.subr.mxu0 0.0
    %82 = vmatpush1.msra.mxu0 0.0
    %83 = vmatprep.subr.mxu0 0.0
    %84 = vmatpush1.msra.mxu0 0.0
    %85 = vmatprep.subr.mxu0 0.0
    %86 = vmatpush1.msra.mxu0 0.0
    %87 = vmatprep.subr.mxu0 0.0
    %88 = vmatpush1.msra.mxu0 0.0
    %89 = vmatprep.subr.mxu0 0.0
    %90 = vmatpush1.msra.mxu0 0.0
    %91 = vmatprep.subr.mxu0 0.0
    %92 = vmatpush1.msra.mxu0 0.0
    %93 = vmatprep.subr.mxu0 0.0
    %94 = vmatpush1.msra.mxu0 0.0
    %95 = vmatprep.subr.mxu0 0.0
    %96 = vmatpush1.msra.mxu0 0.0
    %97 = vmatprep.subr.mxu0 0.0
    %98 = vmatpush1.msra.mxu0 0.0
    %99 = vmatprep.subr.mxu0 0.0
    %100 = vmatpush1.msra.mxu0 0.0
    %101 = vmatprep.subr.mxu0 0.0
    %102 = vmatpush1.msra.mxu0 0.0
    %103 = vmatprep.subr.mxu0 0.0
    %104 = vmatpush1.msra.mxu0 0.0
    %105 = vmatprep.subr.mxu0 0.0
    %106 = vmatpush1.msra.mxu0 0.0
    %107 = vmatprep.subr.mxu0 0.0
    %108 = vmatpush1.msra.mxu0 0.0
    %109 = vmatprep.subr.mxu0 0.0
    %110 = vmatpush1.msra.mxu0 0.0
    %111 = vmatprep.subr.mxu0 0.0
    %112 = vmatpush1.msra.mxu0 0.0
    %113 = vmatprep.subr.mxu0 0.0
    %114 = vmatpush1.msra.mxu0 0.0
    %115 = vmatprep.subr.mxu0 0.0
    %116 = vmatpush1.msra.mxu0 0.0
    %117 = vmatprep.subr.mxu0 0.0
    %118 = vmatpush1.msra.mxu0 0.0
    %119 = vmatprep.subr.mxu0 0.0
    %120 = vmatpush1.msra.mxu0 0.0
    %121 = vmatprep.subr.mxu0 0.0
    %122 = vmatpush1.msra.mxu0 0.0
    %123 = vmatprep.subr.mxu0 0.0
    %124 = vmatpush1.msra.mxu0 0.0
    %125 = vmatprep.subr.mxu0 0.0
    %126 = vmatpush1.msra.mxu0 0.0
    %127 = vmatprep.subr.mxu0 0.0
    %128 = vmatpush1.msra.mxu0 0.0
    %129 = vmatprep.subr.mxu0 0.0
    %130 = vmatpush1.msra.mxu0 0.0
    %131 = vmatprep.subr.mxu0 0.0
    %132 = vmatpush1.msra.mxu0 0.0
    %133 = vmatprep.mubr.f32.mxu0 0.0
    %134 = vmatmul.mubr.f32.gmra.mrb[0].mxu0 %v67
    %v135 = vpop.f32.mrb[0].mxu0
    %v136 = vadd.f32 0.0, %v135
    %v137 = vpop.f32.mrb[0].mxu0
    %138 = vdwg.mxu0
    %v140 = vsel %vm65, %v59, 0
    %142 = vmatprep.subr.mxu0 0.0
    %143 = vmatpush1.msra.mxu0 %v61
    %144 = vmatprep.subr.mxu0 0.0
    %145 = vmatpush1.msra.mxu0 %v62
    %146 = vmatprep.subr.mxu0 0.0
    %147 = vmatpush1.msra.mxu0 0.0
    %148 = vmatprep.subr.mxu0 0.0
    %149 = vmatpush1.msra.mxu0 0.0
    %150 = vmatprep.subr.mxu0 0.0
    %151 = vmatpush1.msra.mxu0 0.0
    %152 = vmatprep.subr.mxu0 0.0
    %153 = vmatpush1.msra.mxu0 0.0
    %154 = vmatprep.subr.mxu0 0.0
    %155 = vmatpush1.msra.mxu0 0.0
    %156 = vmatprep.subr.mxu0 0.0
    %157 = vmatpush1.msra.mxu0 0.0
    %158 = vmatprep.subr.mxu0 0.0
    %159 = vmatpush1.msra.mxu0 0.0
    %160 = vmatprep.subr.mxu0 0.0
    %161 = vmatpush1.msra.mxu0 0.0
    %162 = vmatprep.subr.mxu0 0.0
    %163 = vmatpush1.msra.mxu0 0.0
    %164 = vmatprep.subr.mxu0 0.0
    %165 = vmatpush1.msra.mxu0 0.0
    %166 = vmatprep.subr.mxu0 0.0
    %167 = vmatpush1.msra.mxu0 0.0
    %168 = vmatprep.subr.mxu0 0.0
    %169 = vmatpush1.msra.mxu0 0.0
    %170 = vmatprep.subr.mxu0 0.0
    %171 = vmatpush1.msra.mxu0 0.0
    %172 = vmatprep.subr.mxu0 0.0
    %173 = vmatpush1.msra.mxu0 0.0
    %174 = vmatprep.subr.mxu0 0.0
    %175 = vmatpush1.msra.mxu0 0.0
    %176 = vmatprep.subr.mxu0 0.0
    %177 = vmatpush1.msra.mxu0 0.0
    %178 = vmatprep.subr.mxu0 0.0
    %179 = vmatpush1.msra.mxu0 0.0
    %180 = vmatprep.subr.mxu0 0.0
    %181 = vmatpush1.msra.mxu0 0.0
    %182 = vmatprep.subr.mxu0 0.0
    %183 = vmatpush1.msra.mxu0 0.0
    %184 = vmatprep.subr.mxu0 0.0
    %185 = vmatpush1.msra.mxu0 0.0
    %186 = vmatprep.subr.mxu0 0.0
    %187 = vmatpush1.msra.mxu0 0.0
    %188 = vmatprep.subr.mxu0 0.0
    %189 = vmatpush1.msra.mxu0 0.0
    %190 = vmatprep.subr.mxu0 0.0
    %191 = vmatpush1.msra.mxu0 0.0
    %192 = vmatprep.subr.mxu0 0.0
    %193 = vmatpush1.msra.mxu0 0.0
    %194 = vmatprep.subr.mxu0 0.0
    %195 = vmatpush1.msra.mxu0 0.0
    %196 = vmatprep.subr.mxu0 0.0
    %197 = vmatpush1.msra.mxu0 0.0
    %198 = vmatprep.subr.mxu0 0.0
    %199 = vmatpush1.msra.mxu0 0.0
    %200 = vmatprep.subr.mxu0 0.0
    %201 = vmatpush1.msra.mxu0 0.0
    %202 = vmatprep.subr.mxu0 0.0
    %203 = vmatpush1.msra.mxu0 0.0
    %204 = vmatprep.subr.mxu0 0.0
    %205 = vmatpush1.msra.mxu0 0.0
    %206 = vmatprep.mubr.f32.mxu0 0.0
    %207 = vmatmul.mubr.f32.gmra.mrb[0].mxu0 %v140
    %v208 = vpop.f32.mrb[0].mxu0
    %v209 = vadd.f32 %v136, %v208
    %v210 = vpop.f32.mrb[0].mxu0
    %211 = vdwg.mxu0
    %v212 = vld [vmem:[%s4] sm:$0x1]
    %v214 = vlaneseq
    %v215 = vshrl.u32 %v214, 7
    %v216 = vsub.s32 0, %v215
    %v217 = vrot.slane %v212, %v216
    %v219 = vadd.f32 %v209, %v217
    %v220 = vmax.f32 %v219, 0.0
    %v221 = vld [vmem:[%s5] sm:$0xff]
    %v222 = vld [vmem:[%s5 + $0x8] sm:$0xff]
    %v223 = vld [vmem:[%s5 + $0x10] sm:$0xff]
    %v224 = vld [vmem:[%s5 + $0x18] sm:$0xff]
    %v225 = vld [vmem:[%s6] sm:$0x1]
    %v227 = vlaneseq
    %v228 = vshrl.u32 %v227, 7
    %v229 = vsub.s32 0, %v228
    %v230 = vrot.slane %v225, %v229
    %vm232 = vcmask 261120
    %v234 = vsel %vm232, %v220, 0
    %236 = vmatprep.subr.mxu0 0.0
    %237 = vmatpush1.msra.mxu0 %v221
    %238 = vmatprep.subr.mxu0 0.0
    %239 = vmatpush1.msra.mxu0 %v222
    %240 = vmatprep.subr.mxu0 0.0
    %241 = vmatpush1.msra.mxu0 %v223
    %242 = vmatprep.subr.mxu0 0.0
    %243 = vmatpush1.msra.mxu0 %v224
    %244 = vmatprep.subr.mxu0 0.0
    %245 = vmatpush1.msra.mxu0 0.0
    %246 = vmatprep.subr.mxu0 0.0
    %247 = vmatpush1.msra.mxu0 0.0
    %248 = vmatprep.subr.mxu0 0.0
    %249 = vmatpush1.msra.mxu0 0.0
    %250 = vmatprep.subr.mxu0 0.0
    %251 = vmatpush1.msra.mxu0 0.0
    %252 = vmatprep.subr.mxu0 0.0
    %253 = vmatpush1.msra.mxu0 0.0
    %254 = vmatprep.subr.mxu0 0.0
    %255 = vmatpush1.msra.mxu0 0.0
    %256 = vmatprep.subr.mxu0 0.0
    %257 = vmatpush1.msra.mxu0 0.0
    %258 = vmatprep.subr.mxu0 0.0
    %259 = vmatpush1.msra.mxu0 0.0
    %260 = vmatprep.subr.mxu0 0.0
    %261 = vmatpush1.msra.mxu0 0.0
    %262 = vmatprep.subr.mxu0 0.0
    %263 = vmatpush1.msra.mxu0 0.0
    %264 = vmatprep.subr.mxu0 0.0
    %265 = vmatpush1.msra.mxu0 0.0
    %266 = vmatprep.subr.mxu0 0.0
    %267 = vmatpush1.msra.mxu0 0.0
    %268 = vmatprep.subr.mxu0 0.0
    %269 = vmatpush1.msra.mxu0 0.0
    %270 = vmatprep.subr.mxu0 0.0
    %271 = vmatpush1.msra.mxu0 0.0
    %272 = vmatprep.subr.mxu0 0.0
    %273 = vmatpush1.msra.mxu0 0.0
    %274 = vmatprep.subr.mxu0 0.0
    %275 = vmatpush1.msra.mxu0 0.0
    %276 = vmatprep.subr.mxu0 0.0
    %277 = vmatpush1.msra.mxu0 0.0
    %278 = vmatprep.subr.mxu0 0.0
    %279 = vmatpush1.msra.mxu0 0.0
    %280 = vmatprep.subr.mxu0 0.0
    %281 = vmatpush1.msra.mxu0 0.0
    %282 = vmatprep.subr.mxu0 0.0
    %283 = vmatpush1.msra.mxu0 0.0
    %284 = vmatprep.subr.mxu0 0.0
    %285 = vmatpush1.msra.mxu0 0.0
    %286 = vmatprep.subr.mxu0 0.0
    %287 = vmatpush1.msra.mxu0 0.0
    %288 = vmatprep.subr.mxu0 0.0
    %289 = vmatpush1.msra.mxu0 0.0
    %290 = vmatprep.subr.mxu0 0.0
    %291 = vmatpush1.msra.mxu0 0.0
    %292 = vmatprep.subr.mxu0 0.0
    %293 = vmatpush1.msra.mxu0 0.0
    %294 = vmatprep.subr.mxu0 0.0
    %295 = vmatpush1.msra.mxu0 0.0
    %296 = vmatprep.subr.mxu0 0.0
    %297 = vmatpush1.msra.mxu0 0.0
    %298 = vmatprep.subr.mxu0 0.0
    %299 = vmatpush1.msra.mxu0 0.0
    %300 = vmatprep.mubr.f32.mxu0 0.0
    %301 = vmatmul.mubr.f32.gmra.mrb[0].mxu0 %v234
    %v302 = vpop.f32.mrb[0].mxu0
    %v303 = vadd.f32 %v230, %v302
    %v304 = vpop.f32.mrb[0].mxu0
    %305 = vdwg.mxu0
    %v306 = vmax.f32 %v303, 0.0
    %v307 = vld [vmem:[%s7] sm:$0xff]
    %v308 = vld [vmem:[%s7 + $0x8] sm:$0xff]
    %v309 = vld [vmem:[%s7 + $0x10] sm:$0xff]
    %v310 = vld [vmem:[%s7 + $0x18] sm:$0xff]
    %v311 = vld [vmem:[%s8] sm:$0x1]
    %v313 = vlaneseq
    %v314 = vshrl.u32 %v313, 7
    %v315 = vsub.s32 0, %v314
    %v316 = vrot.slane %v311, %v315
    %v319 = vsel %vm232, %v306, 0
    %321 = vmatprep.subr.mxu0 0.0
    %322 = vmatpush1.msra.mxu0 %v307
    %323 = vmatprep.subr.mxu0 0.0
    %324 = vmatpush1.msra.mxu0 %v308
    %325 = vmatprep.subr.mxu0 0.0
    %326 = vmatpush1.msra.mxu0 %v309
    %327 = vmatprep.subr.mxu0 0.0
    %328 = vmatpush1.msra.mxu0 %v310
    %329 = vmatprep.subr.mxu0 0.0
    %330 = vmatpush1.msra.mxu0 0.0
    %331 = vmatprep.subr.mxu0 0.0
    %332 = vmatpush1.msra.mxu0 0.0
    %333 = vmatprep.subr.mxu0 0.0
    %334 = vmatpush1.msra.mxu0 0.0
    %335 = vmatprep.subr.mxu0 0.0
    %336 = vmatpush1.msra.mxu0 0.0
    %337 = vmatprep.subr.mxu0 0.0
    %338 = vmatpush1.msra.mxu0 0.0
    %339 = vmatprep.subr.mxu0 0.0
    %340 = vmatpush1.msra.mxu0 0.0
    %341 = vmatprep.subr.mxu0 0.0
    %342 = vmatpush1.msra.mxu0 0.0
    %343 = vmatprep.subr.mxu0 0.0
    %344 = vmatpush1.msra.mxu0 0.0
    %345 = vmatprep.subr.mxu0 0.0
    %346 = vmatpush1.msra.mxu0 0.0
    %347 = vmatprep.subr.mxu0 0.0
    %348 = vmatpush1.msra.mxu0 0.0
    %349 = vmatprep.subr.mxu0 0.0
    %350 = vmatpush1.msra.mxu0 0.0
    %351 = vmatprep.subr.mxu0 0.0
    %352 = vmatpush1.msra.mxu0 0.0
    %353 = vmatprep.subr.mxu0 0.0
    %354 = vmatpush1.msra.mxu0 0.0
    %355 = vmatprep.subr.mxu0 0.0
    %356 = vmatpush1.msra.mxu0 0.0
    %357 = vmatprep.subr.mxu0 0.0
    %358 = vmatpush1.msra.mxu0 0.0
    %359 = vmatprep.subr.mxu0 0.0
    %360 = vmatpush1.msra.mxu0 0.0
    %361 = vmatprep.subr.mxu0 0.0
    %362 = vmatpush1.msra.mxu0 0.0
    %363 = vmatprep.subr.mxu0 0.0
    %364 = vmatpush1.msra.mxu0 0.0
    %365 = vmatprep.subr.mxu0 0.0
    %366 = vmatpush1.msra.mxu0 0.0
    %367 = vmatprep.subr.mxu0 0.0
    %368 = vmatpush1.msra.mxu0 0.0
    %369 = vmatprep.subr.mxu0 0.0
    %370 = vmatpush1.msra.mxu0 0.0
    %371 = vmatprep.subr.mxu0 0.0
    %372 = vmatpush1.msra.mxu0 0.0
    %373 = vmatprep.subr.mxu0 0.0
    %374 = vmatpush1.msra.mxu0 0.0
    %375 = vmatprep.subr.mxu0 0.0
    %376 = vmatpush1.msra.mxu0 0.0
    %377 = vmatprep.subr.mxu0 0.0
    %378 = vmatpush1.msra.mxu0 0.0
    %379 = vmatprep.subr.mxu0 0.0
    %380 = vmatpush1.msra.mxu0 0.0
    %381 = vmatprep.subr.mxu0 0.0
    %382 = vmatpush1.msra.mxu0 0.0
    %383 = vmatprep.subr.mxu0 0.0
    %384 = vmatpush1.msra.mxu0 0.0
    %385 = vmatprep.mubr.f32.mxu0 0.0
    %386 = vmatmul.mubr.f32.gmra.mrb[0].mxu0 %v319
    %v387 = vpop.f32.mrb[0].mxu0
    %v388 = vadd.f32 %v316, %v387
    %v389 = vpop.f32.mrb[0].mxu0
    %390 = vdwg.mxu0
    %v391 = vlaneseq
    %v392 = vand.u32 %v391, 127
    %vm393 = vcmp.lt.s32.totalorder %v392, 8
    %v394 = vmul.f32 %v388, 1.442695
    %v395 = vpow.pop %v394
    %v396 = vsel %vm393, %v388, %v395
    %397 = vst.msk [vmem:[#allocation7] sm:$0xff] %vm65, %v396
    // Predicated region
    $region46: #{tpu_custom_call.1} parent=1 // pred_check
      _
    $region47: #{tpu_custom_call.1} parent=1 // pred_check_branch
      %399 = sbr.rel (0) target = $region49
    $region48: #{tpu_custom_call.1} parent=1 // pred_region
      %s401 = ssub.s32 128, 128
      %402 = vsyncadd [#allocation4], %s401
      %s404 = sshll.u32 [#allocation7], 4
      %s405 = int_to_ptr.vmem [resolvable:$true] %s404
      %407 = dma.vmem_to_hbm [thread:$0]  %s405, 128, %s9, [#allocation4]
    $region49: #{tpu_custom_call.1} parent=1 // pred_fallthru
      _
    // Predicated region
    $region50: #{tpu_custom_call.1} parent=1 // pred_check
      _
    $region51: #{tpu_custom_call.1} parent=1 // pred_check_branch
      %409 = sbr.rel (0) target = $region53
    $region52: #{tpu_custom_call.1} parent=1 // pred_region
      %410 = dma.done [#allocation4], 128
    $region53: #{tpu_custom_call.1} parent=1 // pred_fallthru
      _
    %411 = vsyncpa [#allocation3], 1
    %412 = vsyncpa [#allocation6], 1
    %413 = vsyncpa [#allocation4], 1

</llo_original>
